<compile_context>
chip_gen: v7x
topology: tpu7x:2x2x1
jax: 0.10.0
libtpu: 0.0.40
codegen_flags: <defaults>
</compile_context>

<pallas_src>
import functools

import jax
import jax.numpy as jnp
from jax import lax
from jax.experimental import pallas as pl
from jax.experimental.pallas import tpu as pltpu

LN_EPS = 1e-5
_NEG_INF = float("-inf")


def _vmem_limit_bytes():
    """Generation-aware scoped-VMEM limit (~70% of physical, capped at 64 MiB)."""
    try:
        cap = int(pltpu.get_tpu_info().vmem_capacity_bytes)
    except Exception:
        cap = 64 * 1024 * 1024          # conservative: v7x per-core VMEM
    return min(int(cap * 0.70), 64 * 1024 * 1024)


def _pick_hw_tile(hw, c, itemsize, budget_bytes, streams=1, max_tile=None):
    """Pick an HW (lane) tile.

    Multiple of 128 targeting 512-1024 lanes, sized so `streams` double-buffered
    (c, tile) slabs fit `budget_bytes`.  Tiles need not divide `hw`: callers use
    a pl.cdiv grid (+ a lane mask in the reduction pass).  Returns the exact
    extent when a single block already covers `hw` (full-dim blocks are exempt
    from the (8,128) divisibility rule)."""
    per_lane = 2 * streams * c * itemsize             # double-buffered bytes/lane
    cap = max(128, (budget_bytes // per_lane) // 128 * 128)
    hw_pad = ((hw + 127) // 128) * 128
    tile = min(1024, cap, hw_pad)
    if max_tile is not None:
        tile = min(tile, max(128, max_tile // 128 * 128))
    if tile >= hw:
        return hw                                      # single full-extent block
    # Prefer an exact divisor near `tile` (no mask / no partial edge block).
    for t in range(tile, 127, -128):
        if hw % t == 0 and 2 * t >= tile:
            return t
    return tile


def _pick_batch_tile(b, per_batch_bytes, budget_bytes):
    """Largest divisor of b whose per-step slab stays under the budget."""
    best = 1
    for bt in range(1, b + 1):
        if b % bt == 0 and bt * per_batch_bytes <= budget_bytes:
            best = bt
    return best


# ---------------------------------------------------------------------------
# Fused kernel: per-batch slab resident in VMEM; pooling + MLP + residual add.
# ---------------------------------------------------------------------------
def _fused_context_kernel(x_ref, wm_ref, w1_ref, b1_ref, g_ref, beta_ref,
                          w2_ref, b2_ref, o_ref):
    x = x_ref[0]                                               # (C, HW)
    # conv_mask logits; the scalar bias is omitted (softmax is shift invariant).
    logits = jnp.dot(wm_ref[...], x,
                     preferred_element_type=jnp.float32)       # (1, HW) f32
    m = jnp.max(logits, axis=-1, keepdims=True)
    p = jnp.exp(logits - m)                                    # (1, HW)
    denom = jnp.sum(p, axis=-1, keepdims=True)                 # (1, 1)
    # Attention-pooled context: MXU contraction over HW in its natural
    # (M=C, K=HW, N=1) form — only the tiny (1, HW) operand gets moved.
    ctx = jnp.einsum("cs,os->co", x, p,
                     preferred_element_type=jnp.float32) / denom   # (C, 1)
    # channel_add_conv: Conv1x1 -> LayerNorm([P,1,1]) -> ReLU -> Conv1x1.
    h = jnp.dot(w1_ref[...], ctx,
                preferred_element_type=jnp.float32) + b1_ref[...]  # (P, 1)
    mu = jnp.mean(h)
    var = jnp.mean((h - mu) ** 2)
    hn = (h - mu) * lax.rsqrt(var + LN_EPS)
    hn = hn * g_ref[...] + beta_ref[...]
    hn = jnp.maximum(hn, 0.0)                                  # ReLU
    add = jnp.dot(w2_ref[...], hn,
                  preferred_element_type=jnp.float32) + b2_ref[...]  # (C, 1)
    # Residual broadcast add straight from the resident slab (no 2nd HBM read).
    # NOTE: for bf16 inputs the add happens in bf16 (tiny rounding vs f32 ref).
    o_ref[0] = x + add.astype(x.dtype)


# ---------------------------------------------------------------------------
# Fallback pass 1: online-softmax attention pooling over HW tiles -> context.
# ---------------------------------------------------------------------------
def _attn_pool_kernel(x_ref, wm_ref, ctx_ref, m_sc, l_sc, acc_sc,
                      *, hw, hw_tile, masked):
    t = pl.program_id(1)

    @pl.when(t == 0)
    def _():
        m_sc[...] = jnp.full_like(m_sc, -jnp.inf)
        l_sc[...] = jnp.zeros_like(l_sc)
        acc_sc[...] = jnp.zeros_like(acc_sc)

    x = x_ref[0]                                               # (C, hw_tile)
    if masked:
        lane = t * hw_tile + lax.broadcasted_iota(jnp.int32, (1, hw_tile), 1)
        valid = lane < hw                                      # (1, hw_tile)
        x = jnp.where(valid, x, jnp.zeros((), x.dtype))        # kill OOB lanes
    logits = jnp.dot(wm_ref[...], x,
                     preferred_element_type=jnp.float32)       # (1, hw_tile)
    if masked:
        logits = jnp.where(valid, logits, _NEG_INF)

    m_prev = m_sc[...]                                         # (1, 1)
    m_new = jnp.maximum(m_prev, jnp.max(logits, axis=-1, keepdims=True))
    alpha = jnp.exp(m_prev - m_new)
    p = jnp.exp(logits - m_new)                                # (1, hw_tile) f32
    l_sc[...] = alpha * l_sc[...] + jnp.sum(p, axis=-1, keepdims=True)
    acc_sc[...] = alpha * acc_sc[...] + jnp.einsum(
        "cs,os->co", x, p, preferred_element_type=jnp.float32)
    m_sc[...] = m_new

    @pl.when(t == pl.num_programs(1) - 1)
    def _():
        ctx_ref[0] = acc_sc[...] / l_sc[...]                   # (C, 1) f32


# ---------------------------------------------------------------------------
# Fallback MLP micro-kernel on the tiny (B, C) context (hoisted out of pass 1).
# ---------------------------------------------------------------------------
def _channel_add_mlp_kernel(ctx_ref, w1t_ref, b1_ref, g_ref, beta_ref,
                            w2t_ref, b2_ref, add_ref):
    ctx = ctx_ref[...]                                         # (B, C) f32
    h = jnp.dot(ctx, w1t_ref[...],
                preferred_element_type=jnp.float32) + b1_ref[...]   # (B, P)
    mu = jnp.mean(h, axis=-1, keepdims=True)
    var = jnp.mean((h - mu) ** 2, axis=-1, keepdims=True)
    hn = (h - mu) * lax.rsqrt(var + LN_EPS)
    hn = hn * g_ref[...] + beta_ref[...]
    hn = jnp.maximum(hn, 0.0)                                  # ReLU
    add_ref[...] = jnp.dot(hn, w2t_ref[...],
                           preferred_element_type=jnp.float32) + b2_ref[...]


# ---------------------------------------------------------------------------
# Fallback pass 2: residual broadcast add, out = x + add.
# ---------------------------------------------------------------------------
def _residual_add_kernel(x_ref, add_ref, o_ref):
    o_ref[...] = x_ref[...] + add_ref[...].astype(o_ref.dtype)


def context_block_forward(x, params, *, force_two_pass=False, max_hw_tile=None):
    """x: (B, C, H, W).  Returns (B, C, H, W)."""
    B, C, H, W = x.shape
    HW = H * W
    P = params["w1"].shape[0]
    itemsize = jnp.dtype(x.dtype).itemsize
    x3 = x.reshape(B, C, HW)

    vmem_limit = _vmem_limit_bytes()
    tile_budget = int(vmem_limit * 0.6)

    # ---- fused path: per-batch slab (+ weights + f32 temporaries) in VMEM ---
    slab = C * HW * itemsize
    weight_bytes = 4 * (C + 2 * P * C + 3 * P + C)             # all f32
    f32_slack = (0 if itemsize == 4 else C * HW * 4) + (2 << 20)
    fused_need = 4 * slab + 2 * weight_bytes + f32_slack       # in+out dbl-buf
    if not force_two_pass and fused_need <= int(vmem_limit * 0.9):
        const = lambda b: (0, 0)
        out3 = pl.pallas_call(
            _fused_context_kernel,
            out_shape=jax.ShapeDtypeStruct((B, C, HW), x.dtype),
            grid=(B,),
            in_specs=[
                pl.BlockSpec((1, C, HW), lambda b: (b, 0, 0)),   # x slab
                pl.BlockSpec((1, C), const),                     # conv_mask w
                pl.BlockSpec((P, C), const),                     # conv1 w
                pl.BlockSpec((P, 1), const),                     # conv1 b
                pl.BlockSpec((P, 1), const),                     # LN gamma
                pl.BlockSpec((P, 1), const),                     # LN beta
                pl.BlockSpec((C, P), const),                     # conv2 w
                pl.BlockSpec((C, 1), const),                     # conv2 b
            ],
            out_specs=pl.BlockSpec((1, C, HW), lambda b: (b, 0, 0)),
            compiler_params=pltpu.CompilerParams(
                dimension_semantics=("parallel",),
                vmem_limit_bytes=vmem_limit),
        )(x3, params["w_mask"], params["w1"], params["b1"],
          params["gamma"], params["beta"], params["w2"], params["b2"])
        return out3.reshape(B, C, H, W)

    # ---- two-pass fallback (slab too large for VMEM) -------------------------
    # Pass 1: attention pooling -> context[B, C, 1]  (x is the only big stream).
    hw_t1 = _pick_hw_tile(HW, C, itemsize, tile_budget, streams=1,
                          max_tile=max_hw_tile)
    t1 = pl.cdiv(HW, hw_t1)
    kern1 = functools.partial(_attn_pool_kernel, hw=HW, hw_tile=hw_t1,
                              masked=(HW % hw_t1 != 0))
    ctx3 = pl.pallas_call(
        kern1,
        out_shape=jax.ShapeDtypeStruct((B, C, 1), jnp.float32),
        grid=(B, t1),
        in_specs=[
            pl.BlockSpec((1, C, hw_t1), lambda b, t: (b, 0, t)),   # x tile
            pl.BlockSpec((1, C), lambda b, t: (0, 0)),             # conv_mask w
        ],
        out_specs=pl.BlockSpec((1, C, 1), lambda b, t: (b, 0, 0)),
        scratch_shapes=[
            pltpu.VMEM((1, 1), jnp.float32),    # running max
            pltpu.VMEM((1, 1), jnp.float32),    # running softmax denominator
            pltpu.VMEM((C, 1), jnp.float32),    # running weighted context
        ],
        compiler_params=pltpu.CompilerParams(
            dimension_semantics=("parallel", "arbitrary"),
            vmem_limit_bytes=vmem_limit),
    )(x3, params["w_mask"])

    # channel_add MLP on the tiny (B, C) context (single-block micro-kernel;
    # keeps the big reduction pass free of double-buffered MLP weights).
    add2 = pl.pallas_call(
        _channel_add_mlp_kernel,
        out_shape=jax.ShapeDtypeStruct((B, C), jnp.float32),
    )(ctx3[:, :, 0], params["w1"].T, params["b1"].T, params["gamma"].T,
      params["beta"].T, params["w2"].T, params["b2"].T)
    add3 = add2[:, :, None]

    # Pass 2: out = x + add  (lane-dense, batch-blocked elementwise).
    hw_t2 = _pick_hw_tile(HW, C, itemsize, tile_budget, streams=2,
                          max_tile=max_hw_tile)
    t2 = pl.cdiv(HW, hw_t2)
    bt = _pick_batch_tile(B, 2 * 2 * C * hw_t2 * itemsize, tile_budget)
    out3 = pl.pallas_call(
        _residual_add_kernel,
        out_shape=jax.ShapeDtypeStruct((B, C, HW), x.dtype),
        grid=(B // bt, t2),
        in_specs=[
            pl.BlockSpec((bt, C, hw_t2), lambda b, t: (b, 0, t)),  # x tile
            pl.BlockSpec((bt, C, 1), lambda b, t: (b, 0, 0)),      # add term
        ],
        out_specs=pl.BlockSpec((bt, C, hw_t2), lambda b, t: (b, 0, t)),
        compiler_params=pltpu.CompilerParams(
            dimension_semantics=("parallel", "parallel"),
            vmem_limit_bytes=vmem_limit),
    )(x3, add3)

    return out3.reshape(B, C, H, W)


def init_params(key, inplanes, ratio):
    planes = int(inplanes * ratio)
    ks = jax.random.split(key, 6)
    scale = 0.1
    return {
        # conv_mask: Conv2d(C, 1, 1)
        "w_mask": scale * jax.random.normal(ks[0], (1, inplanes), jnp.float32),
        "b_mask": scale * jax.random.normal(ks[1], (1, 1), jnp.float32),
        # channel_add_conv[0]: Conv2d(C, P, 1)
        "w1": scale * jax.random.normal(ks[2], (planes, inplanes), jnp.float32),
        "b1": scale * jax.random.normal(ks[3], (planes, 1), jnp.float32),
        # channel_add_conv[1]: LayerNorm([P, 1, 1])  (default affine init)
        "gamma": jnp.ones((planes, 1), jnp.float32),
        "beta": jnp.zeros((planes, 1), jnp.float32),
        # channel_add_conv[3]: Conv2d(P, C, 1)
        "w2": scale * jax.random.normal(ks[4], (inplanes, planes), jnp.float32),
        "b2": scale * jax.random.normal(ks[5], (inplanes, 1), jnp.float32),
    }


def reference_forward(x, p):
    """Pure-JAX reference mirroring the PyTorch module semantics."""
    B, C, H, W = x.shape
    HW = H * W
    xf = x.reshape(B, C, HW)
    logits = jnp.einsum("c,bcs->bs", p["w_mask"][0], xf) + p["b_mask"][0, 0]
    attn = jax.nn.softmax(logits, axis=-1)                       # (B, HW)
    context = jnp.einsum("bcs,bs->bc", xf, attn)                 # (B, C)
    t = context @ p["w1"].T + p["b1"][:, 0]                      # (B, P)
    mu = t.mean(-1, keepdims=True)
    var = ((t - mu) ** 2).mean(-1, keepdims=True)
    tn = (t - mu) / jnp.sqrt(var + LN_EPS) * p["gamma"][:, 0] + p["beta"][:, 0]
    tn = jax.nn.relu(tn)
    add = tn @ p["w2"].T + p["b2"][:, 0]                         # (B, C)
    return x + add[:, :, None, None]


if __name__ == "__main__":
    key = jax.random.PRNGKey(0)
    kx, kp, kx2 = jax.random.split(key, 3)

    B, C, ratio = 2, 16, 0.25          # planes = 4
    params = init_params(kp, C, ratio)

    # 1) Fused single-kernel path, 128-aligned spatial size.
    x = jax.random.normal(kx, (B, C, 16, 16), jnp.float32)
    out = jax.block_until_ready(context_block_forward(x, params))
    ref = reference_forward(x, params)
    assert out.shape == x.shape
    err = float(jnp.max(jnp.abs(out - ref)))
    assert jnp.allclose(out, ref, atol=1e-4, rtol=1e-4), f"fused max err {err}"

    # 2) Fused path on a ragged spatial size (14x14 = 196, like real GCNet).
    x2 = jax.random.normal(kx2, (B, C, 14, 14), jnp.float32)
    out2 = jax.block_until_ready(context_block_forward(x2, params))
    ref2 = reference_forward(x2, params)
    err2 = float(jnp.max(jnp.abs(out2 - ref2)))
    assert jnp.allclose(out2, ref2, atol=1e-4, rtol=1e-4), f"fused ragged err {err2}"

    # 3) Forced two-pass fallback with a 128-lane tile over HW=196: exercises
    #    the cdiv grid + masked partial edge blocks, the hoisted MLP
    #    micro-kernel and the batch-blocked residual pass.
    out3 = jax.block_until_ready(
        context_block_forward(x2, params, force_two_pass=True, max_hw_tile=128))
    err3 = float(jnp.max(jnp.abs(out3 - ref2)))
    assert jnp.allclose(out3, ref2, atol=1e-4, rtol=1e-4), f"two-pass err {err3}"

    print("KERNEL_OK")
</pallas_src>

<mosaic_0001>
module attributes {stable_mosaic.version = 11 : i64} {
  func.func @_fused_context_kernel(%arg0: i32, %arg1: memref<1x16x256xf32, #tpu.memory_space<vmem>>, %arg2: memref<1x16xf32, #tpu.memory_space<vmem>>, %arg3: memref<4x16xf32, #tpu.memory_space<vmem>>, %arg4: memref<4x1xf32, #tpu.memory_space<vmem>>, %arg5: memref<4x1xf32, #tpu.memory_space<vmem>>, %arg6: memref<4x1xf32, #tpu.memory_space<vmem>>, %arg7: memref<16x4xf32, #tpu.memory_space<vmem>>, %arg8: memref<16x1xf32, #tpu.memory_space<vmem>>, %arg9: memref<1x16x256xf32, #tpu.memory_space<vmem>>) attributes {dimension_semantics = [#tpu.dimension_semantics<parallel>], iteration_bounds = array<i64: 2>, scalar_prefetch = 0 : i64, scratch_operands = 0 : i64, tpu.core_type = #tpu.core_type<tc>, window_params = [{transform_indices = @transform_0, window_bounds = array<i64: 1, 16, 256>}, {pipeline_mode = #tpu.pipeline_mode<synchronous>, transform_indices = @transform_1, window_bounds = array<i64: 1, 16>}, {pipeline_mode = #tpu.pipeline_mode<synchronous>, transform_indices = @transform_2, window_bounds = array<i64: 4, 16>}, {pipeline_mode = #tpu.pipeline_mode<synchronous>, transform_indices = @transform_3, window_bounds = array<i64: 4, 1>}, {pipeline_mode = #tpu.pipeline_mode<synchronous>, transform_indices = @transform_4, window_bounds = array<i64: 4, 1>}, {pipeline_mode = #tpu.pipeline_mode<synchronous>, transform_indices = @transform_5, window_bounds = array<i64: 4, 1>}, {pipeline_mode = #tpu.pipeline_mode<synchronous>, transform_indices = @transform_6, window_bounds = array<i64: 16, 4>}, {pipeline_mode = #tpu.pipeline_mode<synchronous>, transform_indices = @transform_7, window_bounds = array<i64: 16, 1>}, {transform_indices = @transform_8, window_bounds = array<i64: 1, 16, 256>}]} {
    %c0 = arith.constant 0 : index
    %c0_0 = arith.constant 0 : index
    %c0_1 = arith.constant 0 : index
    %0 = vector.load %arg1[%c0, %c0_0, %c0_1] : memref<1x16x256xf32, #tpu.memory_space<vmem>>, vector<1x16x256xf32>
    %1 = vector.shape_cast %0 : vector<1x16x256xf32> to vector<16x256xf32>
    %c0_2 = arith.constant 0 : index
    %c0_3 = arith.constant 0 : index
    %2 = vector.load %arg2[%c0_2, %c0_3] : memref<1x16xf32, #tpu.memory_space<vmem>>, vector<1x16xf32>
    %cst = arith.constant dense<0.000000e+00> : vector<1x256xf32>
    %3 = tpu.matmul %2, %1, %cst {dimension_numbers = #tpu.dot_dimension_numbers<[1], [0], [0], [1], [0, 0, 1, 1], [], []>} : vector<1x16xf32>, vector<16x256xf32>, vector<1x256xf32> -> vector<1x256xf32>
    %cst_4 = arith.constant dense<0xFF800000> : vector<1xf32>
    %4 = vector.multi_reduction <maximumf>, %3, %cst_4 [1] : vector<1x256xf32> to vector<1xf32>
    %5 = vector.shape_cast %4 : vector<1xf32> to vector<1x1xf32>
    %6 = vector.broadcast %5 : vector<1x1xf32> to vector<1x256xf32>
    %7 = arith.subf %3, %6 : vector<1x256xf32>
    %8 = math.exp %7 : vector<1x256xf32>
    %cst_5 = arith.constant dense<0.000000e+00> : vector<1xf32>
    %9 = vector.multi_reduction <add>, %8, %cst_5 [1] : vector<1x256xf32> to vector<1xf32>
    %10 = vector.shape_cast %9 : vector<1xf32> to vector<1x1xf32>
    "tpu.trace_start"() <{level = 10 : i32, message = "cs,os->co"}> : () -> ()
    %cst_6 = arith.constant dense<0.000000e+00> : vector<16x1xf32>
    %11 = tpu.matmul %1, %8, %cst_6 {dimension_numbers = #tpu.dot_dimension_numbers<[1], [1], [0], [0], [0, 0, 1, 0], [], []>} : vector<16x256xf32>, vector<1x256xf32>, vector<16x1xf32> -> vector<16x1xf32>
    "tpu.trace_stop"() : () -> ()
    %12 = vector.broadcast %10 : vector<1x1xf32> to vector<16x1xf32>
    %13 = arith.divf %11, %12 : vector<16x1xf32>
    %c0_7 = arith.constant 0 : index
    %c0_8 = arith.constant 0 : index
    %14 = vector.load %arg3[%c0_7, %c0_8] : memref<4x16xf32, #tpu.memory_space<vmem>>, vector<4x16xf32>
    %cst_9 = arith.constant dense<0.000000e+00> : vector<4x1xf32>
    %15 = tpu.matmul %14, %13, %cst_9 {dimension_numbers = #tpu.dot_dimension_numbers<[1], [0], [0], [1], [0, 0, 1, 1], [], []>} : vector<4x16xf32>, vector<16x1xf32>, vector<4x1xf32> -> vector<4x1xf32>
    %c0_10 = arith.constant 0 : index
    %c0_11 = arith.constant 0 : index
    %16 = vector.load %arg4[%c0_10, %c0_11] : memref<4x1xf32, #tpu.memory_space<vmem>>, vector<4x1xf32>
    %17 = arith.addf %15, %16 : vector<4x1xf32>
    %18 = vector.shape_cast %17 : vector<4x1xf32> to vector<1x4x1xf32>
    %cst_12 = arith.constant dense<0.000000e+00> : vector<1xf32>
    %19 = vector.multi_reduction <add>, %18, %cst_12 [1, 2] : vector<1x4x1xf32> to vector<1xf32>
    %20 = vector.shape_cast %19 : vector<1xf32> to vector<1x1x1xf32>
    %21 = vector.extract %20[0, 0, 0] : f32 from vector<1x1x1xf32>
    %cst_13 = arith.constant 4.000000e+00 : f32
    %22 = arith.divf %21, %cst_13 : f32
    %23 = vector.broadcast %22 : f32 to vector<4x1xf32>
    %24 = arith.subf %17, %23 : vector<4x1xf32>
    %25 = arith.mulf %24, %24 : vector<4x1xf32>
    %26 = vector.shape_cast %25 : vector<4x1xf32> to vector<1x4x1xf32>
    %cst_14 = arith.constant dense<0.000000e+00> : vector<1xf32>
    %27 = vector.multi_reduction <add>, %26, %cst_14 [1, 2] : vector<1x4x1xf32> to vector<1xf32>
    %28 = vector.shape_cast %27 : vector<1xf32> to vector<1x1x1xf32>
    %29 = vector.extract %28[0, 0, 0] : f32 from vector<1x1x1xf32>
    %cst_15 = arith.constant 4.000000e+00 : f32
    %30 = arith.divf %29, %cst_15 : f32
    %31 = vector.broadcast %22 : f32 to vector<4x1xf32>
    %32 = arith.subf %17, %31 : vector<4x1xf32>
    %cst_16 = arith.constant 9.99999974E-6 : f32
    %33 = arith.addf %30, %cst_16 : f32
    %34 = math.rsqrt %33 : f32
    %35 = vector.broadcast %34 : f32 to vector<4x1xf32>
    %36 = arith.mulf %32, %35 : vector<4x1xf32>
    %c0_17 = arith.constant 0 : index
    %c0_18 = arith.constant 0 : index
    %37 = vector.load %arg5[%c0_17, %c0_18] : memref<4x1xf32, #tpu.memory_space<vmem>>, vector<4x1xf32>
    %38 = arith.mulf %36, %37 : vector<4x1xf32>
    %c0_19 = arith.constant 0 : index
    %c0_20 = arith.constant 0 : index
    %39 = vector.load %arg6[%c0_19, %c0_20] : memref<4x1xf32, #tpu.memory_space<vmem>>, vector<4x1xf32>
    %40 = arith.addf %38, %39 : vector<4x1xf32>
    %cst_21 = arith.constant 0.000000e+00 : f32
    %41 = vector.broadcast %cst_21 : f32 to vector<4x1xf32>
    %42 = arith.maximumf %40, %41 : vector<4x1xf32>
    %c0_22 = arith.constant 0 : index
    %c0_23 = arith.constant 0 : index
    %43 = vector.load %arg7[%c0_22, %c0_23] : memref<16x4xf32, #tpu.memory_space<vmem>>, vector<16x4xf32>
    %cst_24 = arith.constant dense<0.000000e+00> : vector<16x1xf32>
    %44 = tpu.matmul %43, %42, %cst_24 {dimension_numbers = #tpu.dot_dimension_numbers<[1], [0], [0], [1], [0, 0, 1, 1], [], []>} : vector<16x4xf32>, vector<4x1xf32>, vector<16x1xf32> -> vector<16x1xf32>
    %c0_25 = arith.constant 0 : index
    %c0_26 = arith.constant 0 : index
    %45 = vector.load %arg8[%c0_25, %c0_26] : memref<16x1xf32, #tpu.memory_space<vmem>>, vector<16x1xf32>
    %46 = arith.addf %44, %45 : vector<16x1xf32>
    %47 = vector.broadcast %46 : vector<16x1xf32> to vector<16x256xf32>
    %48 = arith.addf %1, %47 : vector<16x256xf32>
    %c0_27 = arith.constant 0 : index
    %c0_28 = arith.constant 0 : index
    %c0_29 = arith.constant 0 : index
    %49 = vector.load %arg9[%c0_27, %c0_28, %c0_29] : memref<1x16x256xf32, #tpu.memory_space<vmem>>, vector<1x16x256xf32>
    %50 = vector.shape_cast %49 : vector<1x16x256xf32> to vector<16x256xf32>
    %51 = vector.shape_cast %48 : vector<16x256xf32> to vector<1x16x256xf32>
    tpu.vector_store %arg9[%c0_27, %c0_28, %c0_29], %51 {strides = array<i32>} : memref<1x16x256xf32, #tpu.memory_space<vmem>>, vector<1x16x256xf32>,
    return
  }
  func.func @transform_0(%arg0: i32) -> (i32, i32, i32) {
    %c0_i32 = arith.constant 0 : i32
    %c0_i32_0 = arith.constant 0 : i32
    %c0_i32_1 = arith.constant 0 : i32
    return %arg0, %c0_i32, %c0_i32_0 : i32, i32, i32
  }
  func.func @transform_1(%arg0: i32) -> (i32, i32) {
    %c0_i32 = arith.constant 0 : i32
    %c0_i32_0 = arith.constant 0 : i32
    %c0_i32_1 = arith.constant 0 : i32
    return %c0_i32, %c0_i32_0 : i32, i32
  }
  func.func @transform_2(%arg0: i32) -> (i32, i32) {
    %c0_i32 = arith.constant 0 : i32
    %c0_i32_0 = arith.constant 0 : i32
    %c0_i32_1 = arith.constant 0 : i32
    return %c0_i32, %c0_i32_0 : i32, i32
  }
  func.func @transform_3(%arg0: i32) -> (i32, i32) {
    %c0_i32 = arith.constant 0 : i32
    %c0_i32_0 = arith.constant 0 : i32
    %c0_i32_1 = arith.constant 0 : i32
    return %c0_i32, %c0_i32_0 : i32, i32
  }
  func.func @transform_4(%arg0: i32) -> (i32, i32) {
    %c0_i32 = arith.constant 0 : i32
    %c0_i32_0 = arith.constant 0 : i32
    %c0_i32_1 = arith.constant 0 : i32
    return %c0_i32, %c0_i32_0 : i32, i32
  }
  func.func @transform_5(%arg0: i32) -> (i32, i32) {
    %c0_i32 = arith.constant 0 : i32
    %c0_i32_0 = arith.constant 0 : i32
    %c0_i32_1 = arith.constant 0 : i32
    return %c0_i32, %c0_i32_0 : i32, i32
  }
  func.func @transform_6(%arg0: i32) -> (i32, i32) {
    %c0_i32 = arith.constant 0 : i32
    %c0_i32_0 = arith.constant 0 : i32
    %c0_i32_1 = arith.constant 0 : i32
    return %c0_i32, %c0_i32_0 : i32, i32
  }
  func.func @transform_7(%arg0: i32) -> (i32, i32) {
    %c0_i32 = arith.constant 0 : i32
    %c0_i32_0 = arith.constant 0 : i32
    %c0_i32_1 = arith.constant 0 : i32
    return %c0_i32, %c0_i32_0 : i32, i32
  }
  func.func @transform_8(%arg0: i32) -> (i32, i32, i32) {
    %c0_i32 = arith.constant 0 : i32
    %c0_i32_0 = arith.constant 0 : i32
    %c0_i32_1 = arith.constant 0 : i32
    return %arg0, %c0_i32, %c0_i32_0 : i32, i32, i32
  }
}

</mosaic_0001>

<llo_original>
// kernel: tpu_custom_call.1
$region0: #{tpu_custom_call.1}
  #allocation0 [shape = 'u32[]', space=smem, size = 0x4, offset = 0x4, fixed_abs, tag = 'smem constant byte address 0x4 - core index']
  #allocation1 [shape = 'u32[144,128]{1,0:T(1,128)}', space=vmem, size = 0x12000, scoped, tag = 'internal scratch']
  %s0 = inlined_call_operand.hbm [shape: f32[2,16,256], index: 0, kind: input, shape index: {}]
  %s1 = inlined_call_operand.vmem [shape: f32[1,16], index: 1, kind: input, shape index: {}]
  %s2 = inlined_call_operand.vmem [shape: f32[4,16], index: 2, kind: input, shape index: {}]
  %s3 = inlined_call_operand.vmem [shape: f32[4,1], index: 3, kind: input, shape index: {}]
  %s4 = inlined_call_operand.vmem [shape: f32[4,1], index: 4, kind: input, shape index: {}]
  %s5 = inlined_call_operand.vmem [shape: f32[4,1], index: 5, kind: input, shape index: {}]
  %s6 = inlined_call_operand.vmem [shape: f32[16,4], index: 6, kind: input, shape index: {}]
  %s7 = inlined_call_operand.vmem [shape: f32[16,1], index: 7, kind: input, shape index: {}]
  %s8 = inlined_call_operand.hbm [shape: f32[2,16,256], index: 8, kind: output, shape index: {}]
  %s9 = sld [smem:[#allocation0]]
  $region69: #{tpu_custom_call.1} parent=0
    _
  %s11 = ssub.s32 1, %s9
  %s12 = scalar_select 0, %s11, %s9
  $region1: #{tpu_custom_call.1} parent=0
    #allocation2 [shape = 'u8[32768]{0}', space=vmem, size = 0x8000, scoped, tag = 'input window, operand 0']
    #allocation3 [shape = 's32[2]{0}', space=sflag, size = 0x8, scoped, tag = 'scoped memory for tpu_custom_call.1']
    #allocation4 [shape = 's32[2]{0}', space=sflag, size = 0x8, scoped, tag = 'scoped memory for tpu_custom_call.1']
    #allocation5 [shape = 'u8[32768]{0}', space=vmem, size = 0x8000, scoped, tag = 'output window, operand 0']
    %13 = vsyncpa [#allocation3], 0
    %s14 = scalar_lea.sflag [#allocation3], 1
    %15 = vsyncpa %s14, 0
    %16 = vsyncpa [#allocation4], 0
    %s17 = scalar_lea.sflag [#allocation4], 1
    %18 = vsyncpa %s17, 0
    loop: start=0, step=1, limit=4
    $region2: #{tpu_custom_call.1} parent=1 // loop_pre_header
      _
    $region3: #{tpu_custom_call.1} parent=1 // loop_header
      %s20 = sphi 0, %s24
      %p21 = scmp.ge.s32.totalorder %s20, 4
      %s30 = sphi 0, %s32
      %s33 = sphi 0, %s30
      %s34 = sphi 0, %s33
      %s50 = sphi 0, %s34
      %s54 = sphi 0, %s54
      %s56 = sphi 0, %s54
      %s57 = sphi 0, %s56
      %s71 = sphi 0, %s57
      %s75 = sphi 0, %s75
      %s77 = sphi 0, %s75
      %s78 = sphi 0, %s77
      %s92 = sphi 0, %s78
      %s96 = sphi 0, %s96
      %s98 = sphi 0, %s96
      %s99 = sphi 0, %s98
      %s113 = sphi 0, %s99
      %s117 = sphi 0, %s117
      %s119 = sphi 0, %s117
      %s120 = sphi 0, %s119
      %s134 = sphi 0, %s120
      %s138 = sphi 0, %s138
      %s140 = sphi 0, %s138
      %s141 = sphi 0, %s140
      %s155 = sphi 0, %s141
      %s159 = sphi 0, %s159
      %s161 = sphi 0, %s159
      %s162 = sphi 0, %s161
      %s176 = sphi 0, %s162
      %s180 = sphi 0, %s180
      %s182 = sphi 0, %s180
      %s183 = sphi 0, %s182
      %s197 = sphi 0, %s183
      %s203 = sphi 0, %s205
      %s206 = sphi 0, %s203
      %s207 = sphi 0, %s206
      %s223 = sphi 0, %s207
    $region4: #{tpu_custom_call.1} parent=1 // loop_header_branch
      %23 = sbr.rel (%p21) target = $region8
    $region5: #{tpu_custom_call.1} parent=1 // loop_body
      %s25 = ssub.s32 %s20, 1
      %s26 = ssub.s32 %s20, 2
      %s27 = sadd.s32 %s20, 1
      %s28 = ssub.s32 %s20, %s27
      %p29 = scmp.eq.s32.totalorder %s28, 0
      %s31 = sadd.s32 %s30, 1
      %s32 = scalar_select %p29, %s30, %s31
      %p35 = pneg %p29
      %p36 = scmp.eq.s32.totalorder %s20, 1
      %p37 = por %p35, %p36
      %p38 = scmp.ne.s32.totalorder %s30, %s33
      %p39 = scmp.eq.s32.totalorder %s20, 0
      %p40 = por %p38, %p39
      %p41 = scmp.ne.s32.totalorder %s30, %s33
      %p42 = scmp.eq.s32.totalorder %s25, 1
      %p43 = por %p41, %p42
      %p44 = scmp.ne.s32.totalorder %s33, %s34
      %p45 = scmp.eq.s32.totalorder %s25, 0
      %p46 = por %p44, %p45
      %p47 = scmp.ne.s32.totalorder %s33, %s34
      %p48 = scmp.eq.s32.totalorder %s26, 1
      %p49 = por %p47, %p48
      %p51 = scmp.ne.s32.totalorder %s34, %s50
      %p52 = scmp.eq.s32.totalorder %s26, 0
      %p53 = por %p51, %p52
      %s55 = sadd.s32 %s54, 1
      %p58 = scmp.eq.s32.totalorder %s20, 1
      %p59 = scmp.ne.s32.totalorder %s54, %s56
      %p60 = scmp.eq.s32.totalorder %s20, 0
      %p61 = por %p59, %p60
      %p62 = scmp.ne.s32.totalorder %s54, %s56
      %p63 = scmp.eq.s32.totalorder %s25, 1
      %p64 = por %p62, %p63
      %p65 = scmp.ne.s32.totalorder %s56, %s57
      %p66 = scmp.eq.s32.totalorder %s25, 0
      %p67 = por %p65, %p66
      %p68 = scmp.ne.s32.totalorder %s56, %s57
      %p69 = scmp.eq.s32.totalorder %s26, 1
      %p70 = por %p68, %p69
      %p72 = scmp.ne.s32.totalorder %s57, %s71
      %p73 = scmp.eq.s32.totalorder %s26, 0
      %p74 = por %p72, %p73
      %s76 = sadd.s32 %s75, 1
      %p79 = scmp.eq.s32.totalorder %s20, 1
      %p80 = scmp.ne.s32.totalorder %s75, %s77
      %p81 = scmp.eq.s32.totalorder %s20, 0
      %p82 = por %p80, %p81
      %p83 = scmp.ne.s32.totalorder %s75, %s77
      %p84 = scmp.eq.s32.totalorder %s25, 1
      %p85 = por %p83, %p84
      %p86 = scmp.ne.s32.totalorder %s77, %s78
      %p87 = scmp.eq.s32.totalorder %s25, 0
      %p88 = por %p86, %p87
      %p89 = scmp.ne.s32.totalorder %s77, %s78
      %p90 = scmp.eq.s32.totalorder %s26, 1
      %p91 = por %p89, %p90
      %p93 = scmp.ne.s32.totalorder %s78, %s92
      %p94 = scmp.eq.s32.totalorder %s26, 0
      %p95 = por %p93, %p94
      %s97 = sadd.s32 %s96, 1
      %p100 = scmp.eq.s32.totalorder %s20, 1
      %p101 = scmp.ne.s32.totalorder %s96, %s98
      %p102 = scmp.eq.s32.totalorder %s20, 0
      %p103 = por %p101, %p102
      %p104 = scmp.ne.s32.totalorder %s96, %s98
      %p105 = scmp.eq.s32.totalorder %s25, 1
      %p106 = por %p104, %p105
      %p107 = scmp.ne.s32.totalorder %s98, %s99
      %p108 = scmp.eq.s32.totalorder %s25, 0
      %p109 = por %p107, %p108
      %p110 = scmp.ne.s32.totalorder %s98, %s99
      %p111 = scmp.eq.s32.totalorder %s26, 1
      %p112 = por %p110, %p111
      %p114 = scmp.ne.s32.totalorder %s99, %s113
      %p115 = scmp.eq.s32.totalorder %s26, 0
      %p116 = por %p114, %p115
      %s118 = sadd.s32 %s117, 1
      %p121 = scmp.eq.s32.totalorder %s20, 1
      %p122 = scmp.ne.s32.totalorder %s117, %s119
      %p123 = scmp.eq.s32.totalorder %s20, 0
      %p124 = por %p122, %p123
      %p125 = scmp.ne.s32.totalorder %s117, %s119
      %p126 = scmp.eq.s32.totalorder %s25, 1
      %p127 = por %p125, %p126
      %p128 = scmp.ne.s32.totalorder %s119, %s120
      %p129 = scmp.eq.s32.totalorder %s25, 0
      %p130 = por %p128, %p129
      %p131 = scmp.ne.s32.totalorder %s119, %s120
      %p132 = scmp.eq.s32.totalorder %s26, 1
      %p133 = por %p131, %p132
      %p135 = scmp.ne.s32.totalorder %s120, %s134
      %p136 = scmp.eq.s32.totalorder %s26, 0
      %p137 = por %p135, %p136
      %s139 = sadd.s32 %s138, 1
      %p142 = scmp.eq.s32.totalorder %s20, 1
      %p143 = scmp.ne.s32.totalorder %s138, %s140
      %p144 = scmp.eq.s32.totalorder %s20, 0
      %p145 = por %p143, %p144
      %p146 = scmp.ne.s32.totalorder %s138, %s140
      %p147 = scmp.eq.s32.totalorder %s25, 1
      %p148 = por %p146, %p147
      %p149 = scmp.ne.s32.totalorder %s140, %s141
      %p150 = scmp.eq.s32.totalorder %s25, 0
      %p151 = por %p149, %p150
      %p152 = scmp.ne.s32.totalorder %s140, %s141
      %p153 = scmp.eq.s32.totalorder %s26, 1
      %p154 = por %p152, %p153
      %p156 = scmp.ne.s32.totalorder %s141, %s155
      %p157 = scmp.eq.s32.totalorder %s26, 0
      %p158 = por %p156, %p157
      %s160 = sadd.s32 %s159, 1
      %p163 = scmp.eq.s32.totalorder %s20, 1
      %p164 = scmp.ne.s32.totalorder %s159, %s161
      %p165 = scmp.eq.s32.totalorder %s20, 0
      %p166 = por %p164, %p165
      %p167 = scmp.ne.s32.totalorder %s159, %s161
      %p168 = scmp.eq.s32.totalorder %s25, 1
      %p169 = por %p167, %p168
      %p170 = scmp.ne.s32.totalorder %s161, %s162
      %p171 = scmp.eq.s32.totalorder %s25, 0
      %p172 = por %p170, %p171
      %p173 = scmp.ne.s32.totalorder %s161, %s162
      %p174 = scmp.eq.s32.totalorder %s26, 1
      %p175 = por %p173, %p174
      %p177 = scmp.ne.s32.totalorder %s162, %s176
      %p178 = scmp.eq.s32.totalorder %s26, 0
      %p179 = por %p177, %p178
      %s181 = sadd.s32 %s180, 1
      %p184 = scmp.eq.s32.totalorder %s20, 1
      %p185 = scmp.ne.s32.totalorder %s180, %s182
      %p186 = scmp.eq.s32.totalorder %s20, 0
      %p187 = por %p185, %p186
      %p188 = scmp.ne.s32.totalorder %s180, %s182
      %p189 = scmp.eq.s32.totalorder %s25, 1
      %p190 = por %p188, %p189
      %p191 = scmp.ne.s32.totalorder %s182, %s183
      %p192 = scmp.eq.s32.totalorder %s25, 0
      %p193 = por %p191, %p192
      %p194 = scmp.ne.s32.totalorder %s182, %s183
      %p195 = scmp.eq.s32.totalorder %s26, 1
      %p196 = por %p194, %p195
      %p198 = scmp.ne.s32.totalorder %s183, %s197
      %p199 = scmp.eq.s32.totalorder %s26, 0
      %p200 = por %p198, %p199
      %s201 = ssub.s32 %s20, %s27
      %p202 = scmp.eq.s32.totalorder %s201, 0
      %s204 = sadd.s32 %s203, 1
      %s205 = scalar_select %p202, %s203, %s204
      %p208 = pneg %p202
      %p209 = scmp.eq.s32.totalorder %s20, 1
      %p210 = por %p208, %p209
      %p211 = scmp.ne.s32.totalorder %s203, %s206
      %p212 = scmp.eq.s32.totalorder %s20, 0
      %p213 = por %p211, %p212
      %p214 = scmp.ne.s32.totalorder %s203, %s206
      %p215 = scmp.eq.s32.totalorder %s25, 1
      %p216 = por %p214, %p215
      %p217 = scmp.ne.s32.totalorder %s206, %s207
      %p218 = scmp.eq.s32.totalorder %s25, 0
      %p219 = por %p217, %p218
      %p220 = scmp.ne.s32.totalorder %s206, %s207
      %p221 = scmp.eq.s32.totalorder %s26, 1
      %p222 = por %p220, %p221
      %p224 = scmp.ne.s32.totalorder %s207, %s223
      %p225 = scmp.eq.s32.totalorder %s26, 0
      %p226 = por %p224, %p225
      %p227 = scmp.le.s32.totalorder 1, %s20
      %p228 = scmp.lt.s32.totalorder %s20, 3
      %p229 = pnand %p227, %p228
      %p230 = pneg %p229
      // Predicated region
      $region9: #{tpu_custom_call.1} parent=5 // pred_check
        _
      $region10: #{tpu_custom_call.1} parent=5 // pred_check_branch
        %232 = sbr.rel (%p229) target = $region12
      $region11: #{tpu_custom_call.1} parent=5 // pred_region
        %s233 = ssub.s32 %s20, 1
        // Predicated region
        $region13: #{tpu_custom_call.1} parent=11 // pred_check
          %p234 = pneg %p67
        $region14: #{tpu_custom_call.1} parent=11 // pred_check_branch
          %236 = sbr.rel (%p234) target = $region16
        $region15: #{tpu_custom_call.1} parent=11 // pred_region
          _
        $region16: #{tpu_custom_call.1} parent=11 // pred_fallthru
          _
        // Predicated region
        $region17: #{tpu_custom_call.1} parent=11 // pred_check
          %p237 = pneg %p88
        $region18: #{tpu_custom_call.1} parent=11 // pred_check_branch
          %239 = sbr.rel (%p237) target = $region20
        $region19: #{tpu_custom_call.1} parent=11 // pred_region
          _
        $region20: #{tpu_custom_call.1} parent=11 // pred_fallthru
          _
        // Predicated region
        $region21: #{tpu_custom_call.1} parent=11 // pred_check
          %p240 = pneg %p109
        $region22: #{tpu_custom_call.1} parent=11 // pred_check_branch
          %242 = sbr.rel (%p240) target = $region24
        $region23: #{tpu_custom_call.1} parent=11 // pred_region
          _
        $region24: #{tpu_custom_call.1} parent=11 // pred_fallthru
          _
        // Predicated region
        $region25: #{tpu_custom_call.1} parent=11 // pred_check
          %p243 = pneg %p130
        $region26: #{tpu_custom_call.1} parent=11 // pred_check_branch
          %245 = sbr.rel (%p243) target = $region28
        $region27: #{tpu_custom_call.1} parent=11 // pred_region
          _
        $region28: #{tpu_custom_call.1} parent=11 // pred_fallthru
          _
        // Predicated region
        $region29: #{tpu_custom_call.1} parent=11 // pred_check
          %p246 = pneg %p151
        $region30: #{tpu_custom_call.1} parent=11 // pred_check_branch
          %248 = sbr.rel (%p246) target = $region32
        $region31: #{tpu_custom_call.1} parent=11 // pred_region
          _
        $region32: #{tpu_custom_call.1} parent=11 // pred_fallthru
          _
        // Predicated region
        $region33: #{tpu_custom_call.1} parent=11 // pred_check
          %p249 = pneg %p172
        $region34: #{tpu_custom_call.1} parent=11 // pred_check_branch
          %251 = sbr.rel (%p249) target = $region36
        $region35: #{tpu_custom_call.1} parent=11 // pred_region
          _
        $region36: #{tpu_custom_call.1} parent=11 // pred_fallthru
          _
        // Predicated region
        $region37: #{tpu_custom_call.1} parent=11 // pred_check
          %p252 = pneg %p193
        $region38: #{tpu_custom_call.1} parent=11 // pred_check_branch
          %254 = sbr.rel (%p252) target = $region40
        $region39: #{tpu_custom_call.1} parent=11 // pred_region
          _
        $region40: #{tpu_custom_call.1} parent=11 // pred_fallthru
          _
      $region12: #{tpu_custom_call.1} parent=5 // pred_fallthru
        _
      %p255 = scmp.lt.s32.totalorder %s20, 2
      // Predicated region
      $region41: #{tpu_custom_call.1} parent=5 // pred_check
        %p256 = pneg %p255
      $region42: #{tpu_custom_call.1} parent=5 // pred_check_branch
        %258 = sbr.rel (%p256) target = $region44
      $region43: #{tpu_custom_call.1} parent=5 // pred_region
        // Predicated region
        $region45: #{tpu_custom_call.1} parent=43 // pred_check
          %p259 = pneg %p40
        $region46: #{tpu_custom_call.1} parent=43 // pred_check_branch
          %261 = sbr.rel (%p259) target = $region48
        $region47: #{tpu_custom_call.1} parent=43 // pred_region
          %s262 = sand.u32 %s30, 1
          %s263 = scalar_lea.sflag [#allocation3], %s262
          %s264 = sand.u32 %s30, 1
          %s265 = smul.addr %s264, 32
          %s266 = scalar_lea.vmem [#allocation2], %s265
          %s268 = ssub.s32 512, 512
          %269 = vsyncadd %s263, %s268
          %s270 = smul.addr %s20, 4
          %s271 = smul.addr %s270, 128
          %s272 = scalar_lea.hbm %s0, %s271
          %s273 = sshll.u32 %s266, 4
          %s274 = int_to_ptr.vmem [resolvable:$true] %s273
          %279 = dma.hbm_to_vmem [thread:$0]  %s272, 512, %s274, %s263, 256, 256, 16
        $region48: #{tpu_custom_call.1} parent=43 // pred_fallthru
          _
      $region44: #{tpu_custom_call.1} parent=5 // pred_fallthru
        _
      %p280 = scmp.le.s32.totalorder 1, %s20
      %p281 = scmp.lt.s32.totalorder %s20, 3
      %p282 = pnand %p280, %p281
      %p283 = pneg %p282
      // Predicated region
      $region49: #{tpu_custom_call.1} parent=5 // pred_check
        _
      $region50: #{tpu_custom_call.1} parent=5 // pred_check_branch
        %285 = sbr.rel (%p282) target = $region52
      $region51: #{tpu_custom_call.1} parent=5 // pred_region
        %s286 = ssub.s32 %s20, 1
        %s287 = sand.u32 %s33, 1
        %s288 = scalar_lea.sflag [#allocation3], %s287
        %s289 = sand.u32 %s33, 1
        %s290 = smul.addr %s289, 32
        %s291 = scalar_lea.vmem [#allocation2], %s290
        // Predicated region
        $region53: #{tpu_custom_call.1} parent=51 // pred_check
          %p292 = pneg %p46
        $region54: #{tpu_custom_call.1} parent=51 // pred_check_branch
          %294 = sbr.rel (%p292) target = $region56
        $region55: #{tpu_custom_call.1} parent=51 // pred_region
          %295 = dma.done %s288, 512
        $region56: #{tpu_custom_call.1} parent=51 // pred_fallthru
          _
        %s296 = sand.u32 %s33, 1
        %s297 = scalar_lea.sflag [#allocation3], %s296
        %s298 = sand.u32 %s33, 1
        %s299 = smul.addr %s298, 32
        %s300 = scalar_lea.vmem [#allocation2], %s299
        %p301 = pneg %p46
        %p302 = pneg %p43
        %p303 = pneg %p67
        %p304 = pneg %p64
        %p305 = pneg %p88
        %p306 = pneg %p85
        %p307 = pneg %p109
        %p308 = pneg %p106
        %p309 = pneg %p130
        %p310 = pneg %p127
        %p311 = pneg %p151
        %p312 = pneg %p148
        %p313 = pneg %p172
        %p314 = pneg %p169
        %p315 = pneg %p193
        %p316 = pneg %p190
        %p317 = pneg %p219
        %p318 = pneg %p216
        %s319 = sand.u32 %s206, 1
        %s320 = scalar_lea.sflag [#allocation4], %s319
        %s321 = sand.u32 %s206, 1
        %s322 = smul.addr %s321, 32
        %s323 = scalar_lea.vmem [#allocation5], %s322
        %v324 = vld [vmem:[%s291] sm:$0xff]
        %v325 = vld [vmem:[%s291 + $0x8] sm:$0xff]
        %v326 = vld [vmem:[%s291 + $0x10] sm:$0xff]
        %v327 = vld [vmem:[%s291 + $0x18] sm:$0xff]
        %v328 = vld [vmem:[%s1] sm:$0x1]
        %vm329 = vcmask 130048
        %v331 = vsel %vm329, %v328, 0
        %333 = vmatprep.subr.mxu0 %v325
        %334 = vmatpush1.msra.mxu0 %v324
        %335 = vmatprep.subr.mxu0 %v327
        %336 = vmatpush1.msra.mxu0 %v326
        %337 = vmatprep.subr.mxu0 0.0
        %338 = vmatpush1.msra.mxu0 0.0
        %339 = vmatprep.subr.mxu0 0.0
        %340 = vmatpush1.msra.mxu0 0.0
        %341 = vmatprep.subr.mxu0 0.0
        %342 = vmatpush1.msra.mxu0 0.0
        %343 = vmatprep.subr.mxu0 0.0
        %344 = vmatpush1.msra.mxu0 0.0
        %345 = vmatprep.subr.mxu0 0.0
        %346 = vmatpush1.msra.mxu0 0.0
        %347 = vmatprep.subr.mxu0 0.0
        %348 = vmatpush1.msra.mxu0 0.0
        %349 = vmatprep.subr.mxu0 0.0
        %350 = vmatpush1.msra.mxu0 0.0
        %351 = vmatprep.subr.mxu0 0.0
        %352 = vmatpush1.msra.mxu0 0.0
        %353 = vmatprep.subr.mxu0 0.0
        %354 = vmatpush1.msra.mxu0 0.0
        %355 = vmatprep.subr.mxu0 0.0
        %356 = vmatpush1.msra.mxu0 0.0
        %357 = vmatprep.subr.mxu0 0.0
        %358 = vmatpush1.msra.mxu0 0.0
        %359 = vmatprep.subr.mxu0 0.0
        %360 = vmatpush1.msra.mxu0 0.0
        %361 = vmatprep.subr.mxu0 0.0
        %362 = vmatpush1.msra.mxu0 0.0
        %363 = vmatprep.subr.mxu0 0.0
        %364 = vmatpush1.msra.mxu0 0.0
        %365 = vmatprep.subr.mxu0 0.0
        %366 = vmatpush1.msra.mxu0 0.0
        %367 = vmatprep.subr.mxu0 0.0
        %368 = vmatpush1.msra.mxu0 0.0
        %369 = vmatprep.subr.mxu0 0.0
        %370 = vmatpush1.msra.mxu0 0.0
        %371 = vmatprep.subr.mxu0 0.0
        %372 = vmatpush1.msra.mxu0 0.0
        %373 = vmatprep.subr.mxu0 0.0
        %374 = vmatpush1.msra.mxu0 0.0
        %375 = vmatprep.subr.mxu0 0.0
        %376 = vmatpush1.msra.mxu0 0.0
        %377 = vmatprep.subr.mxu0 0.0
        %378 = vmatpush1.msra.mxu0 0.0
        %379 = vmatprep.subr.mxu0 0.0
        %380 = vmatpush1.msra.mxu0 0.0
        %381 = vmatprep.subr.mxu0 0.0
        %382 = vmatpush1.msra.mxu0 0.0
        %383 = vmatprep.subr.mxu0 0.0
        %384 = vmatpush1.msra.mxu0 0.0
        %385 = vmatprep.subr.mxu0 0.0
        %386 = vmatpush1.msra.mxu0 0.0
        %387 = vmatprep.subr.mxu0 0.0
        %388 = vmatpush1.msra.mxu0 0.0
        %389 = vmatprep.subr.mxu0 0.0
        %390 = vmatpush1.msra.mxu0 0.0
        %391 = vmatprep.subr.mxu0 0.0
        %392 = vmatpush1.msra.mxu0 0.0
        %393 = vmatprep.subr.mxu0 0.0
        %394 = vmatpush1.msra.mxu0 0.0
        %395 = vmatprep.subr.mxu0 0.0
        %396 = vmatpush1.msra.mxu0 0.0
        %397 = vmatprep.mubr.f32.mxu0 0.0
        %398 = vmatmul.mubr.f32.gmra.mrb[0].mxu0 %v331
        %v399 = vpop.f32.mrb[0].mxu0
        %v400 = vadd.f32 0.0, %v399
        %v401 = vpop.f32.mrb[0].mxu0
        %v402 = vadd.f32 0.0, %v401
        %403 = vdwg.mxu0
        %vm404 = vcmask 1040384
        %v405 = vsel %vm404, %v400, -inf
        %v406 = vsel %vm404, %v402, -inf
        %v407 = vmax.f32 %v405, %v406
        %408 = vmax.xlane.f32.xlu0 %v407
        %v409 = vpop.xlane.xlu0 %408
        %v410 = vsub.f32 %v400, %v409
        %v411 = vsub.f32 %v402, %v409
        %v412 = vmul.f32 %v410, 1.442695
        %v413 = vpow.pop %v412
        %v414 = vmul.f32 %v411, 1.442695
        %v415 = vpow.pop %v414
        %v416 = vsel %vm404, %v413, 0.0
        %v417 = vsel %vm404, %v415, 0.0
        %v418 = vadd.f32 %v416, %v417
        %419 = vadd.xlane.f32.xlu0 %v418
        %v420 = vpop.xlane.xlu0 %419
        %v421 = vlaneseq
        %v422 = vshrl.u32 %v421, 7
        %v423 = vsub.s32 0, %v422
        %v424 = vrot.slane %v413, %v423
        %v425 = vlaneseq
        %v426 = vshrl.u32 %v425, 7
        %v427 = vsub.s32 0, %v426
        %v428 = vrot.slane %v415, %v427
        %v429 = vmul.f32 %v324, %v424
        %v430 = vmul.f32 %v325, %v428
        %v431 = vmul.f32 %v326, %v424
        %v432 = vmul.f32 %v327, %v428
        %v433 = vadd.f32 %v429, %v430
        %434 = vadd.xlane.f32.xlu0 %v433
        %v435 = vpop.xlane.xlu0 %434
        %v436 = vadd.f32 %v431, %v432
        %437 = vadd.xlane.f32.xlu0 %v436
        %v438 = vpop.xlane.xlu0 %437
        %v439 = vlaneseq
        %v440 = vshrl.u32 %v439, 7
        %v441 = vsub.s32 0, %v440
        %v442 = vrot.slane %v420, %v441
        %v443 = vrcp.pop %v442
        %v444 = vmul.f32 %v435, %v443
        %v445 = vmul.f32 %v438, %v443
        %v446 = vld [vmem:[%s2] sm:$0xf]
        %v447 = vld [vmem:[%s3] sm:$0xf]
        %v449 = vsel %vm329, %v446, 0
        %451 = vmatprep.subr.mxu0 0.0
        %452 = vmatpush1.msra.mxu0 %v444
        %453 = vmatprep.subr.mxu0 0.0
        %454 = vmatpush1.msra.mxu0 %v445
        %455 = vmatprep.subr.mxu0 0.0
        %456 = vmatpush1.msra.mxu0 0.0
        %457 = vmatprep.subr.mxu0 0.0
        %458 = vmatpush1.msra.mxu0 0.0
        %459 = vmatprep.subr.mxu0 0.0
        %460 = vmatpush1.msra.mxu0 0.0
        %461 = vmatprep.subr.mxu0 0.0
        %462 = vmatpush1.msra.mxu0 0.0
        %463 = vmatprep.subr.mxu0 0.0
        %464 = vmatpush1.msra.mxu0 0.0
        %465 = vmatprep.subr.mxu0 0.0
        %466 = vmatpush1.msra.mxu0 0.0
        %467 = vmatprep.subr.mxu0 0.0
        %468 = vmatpush1.msra.mxu0 0.0
        %469 = vmatprep.subr.mxu0 0.0
        %470 = vmatpush1.msra.mxu0 0.0
        %471 = vmatprep.subr.mxu0 0.0
        %472 = vmatpush1.msra.mxu0 0.0
        %473 = vmatprep.subr.mxu0 0.0
        %474 = vmatpush1.msra.mxu0 0.0
        %475 = vmatprep.subr.mxu0 0.0
        %476 = vmatpush1.msra.mxu0 0.0
        %477 = vmatprep.subr.mxu0 0.0
        %478 = vmatpush1.msra.mxu0 0.0
        %479 = vmatprep.subr.mxu0 0.0
        %480 = vmatpush1.msra.mxu0 0.0
        %481 = vmatprep.subr.mxu0 0.0
        %482 = vmatpush1.msra.mxu0 0.0
        %483 = vmatprep.subr.mxu0 0.0
        %484 = vmatpush1.msra.mxu0 0.0
        %485 = vmatprep.subr.mxu0 0.0
        %486 = vmatpush1.msra.mxu0 0.0
        %487 = vmatprep.subr.mxu0 0.0
        %488 = vmatpush1.msra.mxu0 0.0
        %489 = vmatprep.subr.mxu0 0.0
        %490 = vmatpush1.msra.mxu0 0.0
        %491 = vmatprep.subr.mxu0 0.0
        %492 = vmatpush1.msra.mxu0 0.0
        %493 = vmatprep.subr.mxu0 0.0
        %494 = vmatpush1.msra.mxu0 0.0
        %495 = vmatprep.subr.mxu0 0.0
        %496 = vmatpush1.msra.mxu0 0.0
        %497 = vmatprep.subr.mxu0 0.0
        %498 = vmatpush1.msra.mxu0 0.0
        %499 = vmatprep.subr.mxu0 0.0
        %500 = vmatpush1.msra.mxu0 0.0
        %501 = vmatprep.subr.mxu0 0.0
        %502 = vmatpush1.msra.mxu0 0.0
        %503 = vmatprep.subr.mxu0 0.0
        %504 = vmatpush1.msra.mxu0 0.0
        %505 = vmatprep.subr.mxu0 0.0
        %506 = vmatpush1.msra.mxu0 0.0
        %507 = vmatprep.subr.mxu0 0.0
        %508 = vmatpush1.msra.mxu0 0.0
        %509 = vmatprep.subr.mxu0 0.0
        %510 = vmatpush1.msra.mxu0 0.0
        %511 = vmatprep.subr.mxu0 0.0
        %512 = vmatpush1.msra.mxu0 0.0
        %513 = vmatprep.subr.mxu0 0.0
        %514 = vmatpush1.msra.mxu0 0.0
        %515 = vmatprep.mubr.f32.mxu0 0.0
        %516 = vmatmul.mubr.f32.gmra.mrb[0].mxu0 %v449
        %v517 = vpop.f32.mrb[0].mxu0
        %v518 = vadd.f32 %v447, %v517
        %v519 = vpop.f32.mrb[0].mxu0
        %520 = vdwg.mxu0
        %vm521 = vcmask 3072
        %v522 = vsel %vm521, %v518, 0.0
        %523 = vadd.xlane.f32.xlu0 %v522
        %v524 = vpop.xlane.xlu0 %523
        %v525 = vrot.slane %v524, 4
        %v526 = vadd.f32 %v524, %v525
        %v527 = vrot.slane %v526, 2
        %v528 = vadd.f32 %v526, %v527
        %v529 = vrot.slane %v528, 1
        %v530 = vadd.f32 %v528, %v529
        %s531 = vtos %v530
        %v532 = vrcp.pop 4.0
        %s533 = vtos %v532
        %s534 = smul.f32 %s531, %s533
        %v535 = vstv %s534
        %v536 = vsub.f32 %v518, %v535
        %v537 = vmul.f32 %v536, %v536
        %v538 = vsel %vm521, %v537, 0.0
        %539 = vadd.xlane.f32.xlu0 %v538
        %v540 = vpop.xlane.xlu0 %539
        %v541 = vrot.slane %v540, 4
        %v542 = vadd.f32 %v540, %v541
        %v543 = vrot.slane %v542, 2
        %v544 = vadd.f32 %v542, %v543
        %v545 = vrot.slane %v544, 1
        %v546 = vadd.f32 %v544, %v545
        %s547 = vtos %v546
        %v548 = vrcp.pop 4.0
        %s549 = vtos %v548
        %s550 = smul.f32 %s547, %s549
        %s551 = sadd.f32 %s550, 1e-05
        %v552 = vstv %s551
        %v553 = vrsqrt.pop %v552
        %s554 = vtos %v553
        %v555 = vstv %s554
        %v556 = vmul.f32 %v536, %v555
        %v557 = vld [vmem:[%s4] sm:$0xf]
        %v558 = vmul.f32 %v556, %v557
        %v559 = vld [vmem:[%s5] sm:$0xf]
        %v560 = vadd.f32 %v558, %v559
        %v561 = vmax.f32 %v560, 0.0
        %v562 = vld [vmem:[%s6] sm:$0xff]
        %v563 = vld [vmem:[%s6 + $0x8] sm:$0xff]
        %v564 = vld [vmem:[%s7] sm:$0xff]
        %v565 = vld [vmem:[%s7 + $0x8] sm:$0xff]
        %vm566 = vcmask 31744
        %v568 = vsel %vm566, %v562, 0
        %v571 = vsel %vm566, %v563, 0
        %vm573 = vcmask 1043456
        %v575 = vsel %vm573, %v561, 0
        %577 = vmatprep.subr.mxu0 0.0
        %578 = vmatpush1.msra.mxu0 %v575
        %579 = vmatprep.subr.mxu0 0.0
        %580 = vmatpush1.msra.mxu0 0.0
        %581 = vmatprep.subr.mxu0 0.0
        %582 = vmatpush1.msra.mxu0 0.0
        %583 = vmatprep.subr.mxu0 0.0
        %584 = vmatpush1.msra.mxu0 0.0
        %585 = vmatprep.subr.mxu0 0.0
        %586 = vmatpush1.msra.mxu0 0.0
        %587 = vmatprep.subr.mxu0 0.0
        %588 = vmatpush1.msra.mxu0 0.0
        %589 = vmatprep.subr.mxu0 0.0
        %590 = vmatpush1.msra.mxu0 0.0
        %591 = vmatprep.subr.mxu0 0.0
        %592 = vmatpush1.msra.mxu0 0.0
        %593 = vmatprep.subr.mxu0 0.0
        %594 = vmatpush1.msra.mxu0 0.0
        %595 = vmatprep.subr.mxu0 0.0
        %596 = vmatpush1.msra.mxu0 0.0
        %597 = vmatprep.subr.mxu0 0.0
        %598 = vmatpush1.msra.mxu0 0.0
        %599 = vmatprep.subr.mxu0 0.0
        %600 = vmatpush1.msra.mxu0 0.0
        %601 = vmatprep.subr.mxu0 0.0
        %602 = vmatpush1.msra.mxu0 0.0
        %603 = vmatprep.subr.mxu0 0.0
        %604 = vmatpush1.msra.mxu0 0.0
        %605 = vmatprep.subr.mxu0 0.0
        %606 = vmatpush1.msra.mxu0 0.0
        %607 = vmatprep.subr.mxu0 0.0
        %608 = vmatpush1.msra.mxu0 0.0
        %609 = vmatprep.subr.mxu0 0.0
        %610 = vmatpush1.msra.mxu0 0.0
        %611 = vmatprep.subr.mxu0 0.0
        %612 = vmatpush1.msra.mxu0 0.0
        %613 = vmatprep.subr.mxu0 0.0
        %614 = vmatpush1.msra.mxu0 0.0
        %615 = vmatprep.subr.mxu0 0.0
        %616 = vmatpush1.msra.mxu0 0.0
        %617 = vmatprep.subr.mxu0 0.0
        %618 = vmatpush1.msra.mxu0 0.0
        %619 = vmatprep.subr.mxu0 0.0
        %620 = vmatpush1.msra.mxu0 0.0
        %621 = vmatprep.subr.mxu0 0.0
        %622 = vmatpush1.msra.mxu0 0.0
        %623 = vmatprep.subr.mxu0 0.0
        %624 = vmatpush1.msra.mxu0 0.0
        %625 = vmatprep.subr.mxu0 0.0
        %626 = vmatpush1.msra.mxu0 0.0
        %627 = vmatprep.subr.mxu0 0.0
        %628 = vmatpush1.msra.mxu0 0.0
        %629 = vmatprep.subr.mxu0 0.0
        %630 = vmatpush1.msra.mxu0 0.0
        %631 = vmatprep.subr.mxu0 0.0
        %632 = vmatpush1.msra.mxu0 0.0
        %633 = vmatprep.subr.mxu0 0.0
        %634 = vmatpush1.msra.mxu0 0.0
        %635 = vmatprep.subr.mxu0 0.0
        %636 = vmatpush1.msra.mxu0 0.0
        %637 = vmatprep.subr.mxu0 0.0
        %638 = vmatpush1.msra.mxu0 0.0
        %639 = vmatprep.subr.mxu0 0.0
        %640 = vmatpush1.msra.mxu0 0.0
        %641 = vmatprep.mubr.f32.mxu0 0.0
        %642 = vmatmul.mubr.f32.gmra.mrb[0].mxu0 %v568
        %v643 = vpop.f32.mrb[0].mxu0
        %v644 = vadd.f32 %v564, %v643
        %v645 = vpop.f32.mrb[0].mxu0
        %646 = vmatprep.mubr.f32.mxu0 0.0
        %647 = vmatmul.mubr.f32.gmra.mrb[0].mxu0 %v571
        %v648 = vpop.f32.mrb[0].mxu0
        %v649 = vadd.f32 %v565, %v648
        %v650 = vpop.f32.mrb[0].mxu0
        %651 = vdwg.mxu0
        %653 = vset.pattern.permute.xlu0 0
        %654 = vperm.xlu0 %653, %v644
        %v655 = vpop.permute.xlu0 %654
        %658 = vset.pattern.permute.xlu0 0
        %659 = vperm.xlu0 %658, %v649
        %v660 = vpop.permute.xlu0 %659
        %v662 = vadd.f32 %v324, %v655
        %v663 = vadd.f32 %v325, %v655
        %v664 = vadd.f32 %v326, %v660
        %v665 = vadd.f32 %v327, %v660
        %666 = vst [vmem:[%s323] sm:$0xff] %v662
        %667 = vst [vmem:[%s323 + $0x8] sm:$0xff] %v663
        %668 = vst [vmem:[%s323 + $0x10] sm:$0xff] %v664
        %669 = vst [vmem:[%s323 + $0x18] sm:$0xff] %v665
        %s670 = sand.u32 %s206, 1
        %s671 = scalar_lea.sflag [#allocation4], %s670
        %s672 = sand.u32 %s206, 1
        %s673 = smul.addr %s672, 32
        %s674 = scalar_lea.vmem [#allocation5], %s673
        // Predicated region
        $region57: #{tpu_custom_call.1} parent=51 // pred_check
          %p675 = pneg %p216
        $region58: #{tpu_custom_call.1} parent=51 // pred_check_branch
          %677 = sbr.rel (%p675) target = $region60
        $region59: #{tpu_custom_call.1} parent=51 // pred_region
          %s679 = ssub.s32 512, 512
          %680 = vsyncadd %s671, %s679
          %s681 = smul.addr %s25, 4
          %s682 = smul.addr %s681, 128
          %s683 = scalar_lea.hbm %s8, %s682
          %s684 = sshll.u32 %s674, 4
          %s685 = int_to_ptr.vmem [resolvable:$true] %s684
          %690 = dma.vmem_to_hbm [thread:$0]  %s685, 512, %s683, %s671, 256, 256, 16
        $region60: #{tpu_custom_call.1} parent=51 // pred_fallthru
          _
      $region52: #{tpu_custom_call.1} parent=5 // pred_fallthru
        _
      %p691 = scmp.le.s32.totalorder 2, %s20
      // Predicated region
      $region61: #{tpu_custom_call.1} parent=5 // pred_check
        %p692 = pneg %p691
      $region62: #{tpu_custom_call.1} parent=5 // pred_check_branch
        %694 = sbr.rel (%p692) target = $region64
      $region63: #{tpu_custom_call.1} parent=5 // pred_region
        %s695 = ssub.s32 %s20, 2
        // Predicated region
        $region65: #{tpu_custom_call.1} parent=63 // pred_check
          %p696 = pneg %p222
        $region66: #{tpu_custom_call.1} parent=63 // pred_check_branch
          %698 = sbr.rel (%p696) target = $region68
        $region67: #{tpu_custom_call.1} parent=63 // pred_region
          %s699 = sand.u32 %s207, 1
          %s700 = scalar_lea.sflag [#allocation4], %s699
          %s701 = sand.u32 %s207, 1
          %s702 = smul.addr %s701, 32
          %s703 = scalar_lea.vmem [#allocation5], %s702
          %704 = dma.done %s700, 512
        $region68: #{tpu_custom_call.1} parent=63 // pred_fallthru
          _
      $region64: #{tpu_custom_call.1} parent=5 // pred_fallthru
        _
    $region6: #{tpu_custom_call.1} parent=1 // loop_footer
      %s24 = sadd.s32 1, %s20
    $region7: #{tpu_custom_call.1} parent=1 // loop_footer_branch
      %19 = sbr.rel target = $region3
    $region8: #{tpu_custom_call.1} parent=1 // loop_exit
      _
    %705 = vsyncpa [#allocation3], 1
    %s706 = scalar_lea.sflag [#allocation3], 1
    %707 = vsyncpa %s706, 1
    %708 = vsyncpa [#allocation4], 1
    %s709 = scalar_lea.sflag [#allocation4], 1
    %710 = vsyncpa %s709, 1

</llo_original>
